<compile_context>
chip_gen: v7x
topology: tpu7x:2x2x1
jax: 0.10.0
libtpu: 0.0.40
codegen_flags: <defaults>
</compile_context>

<pallas_src>
import functools

import jax
import jax.numpy as jnp
from jax.experimental import pallas as pl
from jax.experimental.pallas import tpu as pltpu

# Logical widths fixed by the PyTorch module spec, and their lane-padded sizes.
H1, H2 = 400, 300
H1_PAD, H2_PAD, A_PAD = 512, 384, 128


def _actor_kernel(x_ref, w1_ref, b1_ref, w2_ref, b2_ref, w3_ref, b3_ref, o_ref,
                  *, max_action: float):
    # One batch tile per grid step; all three layers fused so the 512/384-wide
    # intermediate activations never touch HBM.  Strictly row-independent, so
    # the clipped/padded rows of a partial last batch tile cannot leak into
    # valid output rows.

    # Layer 1: bf16 x (already cast in the wrapper) @ bf16 W1, f32 accumulate.
    h = jnp.dot(x_ref[...], w1_ref[...], preferred_element_type=jnp.float32)
    h = jnp.maximum(h + b1_ref[...], 0.0)                    # relu

    # Layer 2: bf16 MXU dot, f32 accumulate.
    h = jnp.dot(h.astype(w2_ref.dtype), w2_ref[...],
                preferred_element_type=jnp.float32)
    h = jnp.maximum(h + b2_ref[...], 0.0)                    # relu

    # Layer 3: tiny f32 weights (closer parity with the f32 PyTorch module).
    h = jnp.dot(h, w3_ref[...], preferred_element_type=jnp.float32) + b3_ref[...]
    o_ref[...] = (jnp.tanh(h) * jnp.float32(max_action)).astype(o_ref.dtype)


def actor_forward(x, params, max_action: float, *,
                  block_batch: int = 1024, min_grid_steps: int = 1):
    """x: (B, state_dim), any float dtype. Returns (B, action_dim) f32.

    `params` are the lane-padded params from `init_actor_params`.
    On v7x pass min_grid_steps=2 so the "parallel" batch axis shards across
    both TensorCores; on v5e/v6e leave it at 1 (single grid step is fastest).
    """
    w1, b1, w2, b2, w3, b3 = params
    B, S = x.shape
    action_dim = int(getattr(actor_forward, "_action_dim", A_PAD))

    # Halve the x DMA: the first dot runs in bf16 anyway.
    x = x.astype(jnp.bfloat16)

    # Batch tile: single tile if the batch fits, else 8-aligned tiles.  Cap at
    # 2048 to stay inside v5e's 16 MiB default scoped-VMEM budget.
    tb = min(block_batch, 2048, B)
    if min_grid_steps > 1:
        tb = min(tb, max(8, -(-B // min_grid_steps)))
    if tb != B:
        tb = max(8, (tb // 8) * 8)
    grid = (pl.cdiv(B, tb),)

    def resident(arr):  # weights/biases: full array, same block every grid step
        return pl.BlockSpec(arr.shape, lambda i: (0, 0))

    in_specs = [
        pl.BlockSpec((tb, S), lambda i: (i, 0)),   # x, tiled over batch
        resident(w1), resident(b1),
        resident(w2), resident(b2),
        resident(w3), resident(b3),
    ]
    out_specs = pl.BlockSpec((tb, A_PAD), lambda i: (i, 0))   # lane-dense output

    flops = 2 * B * (S * H1_PAD + H1_PAD * H2_PAD + H2_PAD * A_PAD)
    bytes_accessed = (int(x.size) * x.dtype.itemsize
                      + sum(int(p.size) * p.dtype.itemsize for p in params)
                      + B * A_PAD * 4)
    cost = pl.CostEstimate(flops=flops,
                           transcendentals=B * A_PAD,        # tanh
                           bytes_accessed=int(bytes_accessed))

    kernel = functools.partial(_actor_kernel, max_action=float(max_action))
    out_padded = pl.pallas_call(
        kernel,
        out_shape=jax.ShapeDtypeStruct((B, A_PAD), jnp.float32),
        grid=grid,
        in_specs=in_specs,
        out_specs=out_specs,
        compiler_params=pltpu.CompilerParams(
            dimension_semantics=("parallel",)),
        cost_estimate=cost,
    )(x, w1, b1, w2, b2, w3, b3)
    return out_padded[:, :action_dim]


def init_actor_params(key, state_dim: int, action_dim: int,
                      *, weight_dtype=jnp.bfloat16):
    """torch.nn.Linear-style init (U(-1/sqrt(fan_in), +)) with lane padding.

    Weights are stored (in, out), zero-padded once to
      W1: (state_dim, 512), W2: (512, 384), W3: (384, 128)
    so every call runs on clean (8,128) tiles.  W1/W2 are `weight_dtype`
    (bf16 default, MXU-native); W3 and all biases stay f32.
    """
    def linear(k, fan_in, fan_out, pad_in, pad_out, w_dtype):
        kw, kb = jax.random.split(k)
        bound = 1.0 / float(fan_in) ** 0.5
        w = jax.random.uniform(kw, (fan_in, fan_out), jnp.float32, -bound, bound)
        b = jax.random.uniform(kb, (fan_out,), jnp.float32, -bound, bound)
        wp = jnp.zeros((pad_in, pad_out), jnp.float32).at[:fan_in, :fan_out].set(w)
        bp = jnp.zeros((1, pad_out), jnp.float32).at[0, :fan_out].set(b)
        return wp.astype(w_dtype), bp

    k1, k2, k3 = jax.random.split(key, 3)
    w1, b1 = linear(k1, state_dim, H1, state_dim, H1_PAD, weight_dtype)
    w2, b2 = linear(k2, H1, H2, H1_PAD, H2_PAD, weight_dtype)
    w3, b3 = linear(k3, H2, action_dim, H2_PAD, A_PAD, jnp.float32)
    actor_forward._action_dim = action_dim   # remembered for the output slice
    return (w1, b1, w2, b2, w3, b3)


def actor_reference(x, params, max_action: float, action_dim: int):
    """Precision-matched reference: same bf16-dot / f32-accumulate math as the
    kernel, on the padded params (padding is numerically inert)."""
    w1, b1, w2, b2, w3, b3 = params
    xb = x.astype(jnp.bfloat16)
    h = jnp.maximum(jnp.dot(xb, w1, preferred_element_type=jnp.float32) + b1, 0.0)
    h = jnp.maximum(jnp.dot(h.astype(w2.dtype), w2,
                            preferred_element_type=jnp.float32) + b2, 0.0)
    h = jnp.dot(h, w3, preferred_element_type=jnp.float32) + b3
    return (jnp.tanh(h) * max_action)[:, :action_dim]


def actor_reference_f32(x, params, max_action: float, action_dim: int):
    """PyTorch-spec reference: everything upcast to f32."""
    w1, b1, w2, b2, w3, b3 = [p.astype(jnp.float32) for p in params]
    x = x.astype(jnp.float32)
    h = jnp.maximum(x @ w1 + b1, 0.0)
    h = jnp.maximum(h @ w2 + b2, 0.0)
    return (jnp.tanh(h @ w3 + b3) * max_action)[:, :action_dim]


if __name__ == "__main__":
    key = jax.random.PRNGKey(0)
    k_x, k_p, k_x2 = jax.random.split(key, 3)

    state_dim, action_dim, max_action = 16, 8, 2.0
    params = init_actor_params(k_p, state_dim, action_dim)

    # Small batch: single grid step, lane-dense padded output sliced back to A.
    x = jax.random.normal(k_x, (8, state_dim), jnp.float32)
    out = jax.block_until_ready(actor_forward(x, params, max_action))
    assert out.shape == (8, action_dim)
    ref = actor_reference(x, params, max_action, action_dim)
    assert jnp.allclose(out, ref, atol=2e-2, rtol=2e-2), "mismatch vs precision-matched ref"
    ref32 = actor_reference_f32(x, params, max_action, action_dim)  # f32 PyTorch semantics
    assert jnp.allclose(out, ref32, atol=1e-1, rtol=1e-1), "mismatch vs f32 spec ref"

    # Larger batch, non-divisible by the tile: exercises the batch grid,
    # VMEM-resident weights across tiles, the partial last block, and the
    # multi-step (v7x dual-TC) path.
    x2 = jax.random.normal(k_x2, (272, state_dim), jnp.float32)
    out2 = jax.block_until_ready(
        actor_forward(x2, params, max_action, block_batch=128, min_grid_steps=2))
    assert out2.shape == (272, action_dim)
    ref2 = actor_reference(x2, params, max_action, action_dim)
    assert jnp.allclose(out2, ref2, atol=2e-2, rtol=2e-2), "mismatch on gridded batch"

    print("KERNEL_OK")
</pallas_src>

<mosaic_0001>
module attributes {stable_mosaic.version = 11 : i64} {
  func.func @_actor_kernel(%arg0: i32, %arg1: memref<8x16xbf16, #tpu.memory_space<vmem>>, %arg2: memref<16x512xbf16, #tpu.memory_space<vmem>>, %arg3: memref<1x512xf32, #tpu.memory_space<vmem>>, %arg4: memref<512x384xbf16, #tpu.memory_space<vmem>>, %arg5: memref<1x384xf32, #tpu.memory_space<vmem>>, %arg6: memref<384x128xf32, #tpu.memory_space<vmem>>, %arg7: memref<1x128xf32, #tpu.memory_space<vmem>>, %arg8: memref<8x128xf32, #tpu.memory_space<vmem>>) attributes {dimension_semantics = [#tpu.dimension_semantics<parallel>], iteration_bounds = array<i64: 1>, scalar_prefetch = 0 : i64, scratch_operands = 0 : i64, tpu.core_type = #tpu.core_type<tc>, window_params = [{transform_indices = @transform_0, window_bounds = array<i64: 8, 16>}, {pipeline_mode = #tpu.pipeline_mode<synchronous>, transform_indices = @transform_1, window_bounds = array<i64: 16, 512>}, {pipeline_mode = #tpu.pipeline_mode<synchronous>, transform_indices = @transform_2, window_bounds = array<i64: 1, 512>}, {pipeline_mode = #tpu.pipeline_mode<synchronous>, transform_indices = @transform_3, window_bounds = array<i64: 512, 384>}, {pipeline_mode = #tpu.pipeline_mode<synchronous>, transform_indices = @transform_4, window_bounds = array<i64: 1, 384>}, {pipeline_mode = #tpu.pipeline_mode<synchronous>, transform_indices = @transform_5, window_bounds = array<i64: 384, 128>}, {pipeline_mode = #tpu.pipeline_mode<synchronous>, transform_indices = @transform_6, window_bounds = array<i64: 1, 128>}, {transform_indices = @transform_7, window_bounds = array<i64: 8, 128>}]} {
    %c0 = arith.constant 0 : index
    %c0_0 = arith.constant 0 : index
    %0 = vector.load %arg1[%c0, %c0_0] : memref<8x16xbf16, #tpu.memory_space<vmem>>, vector<8x16xbf16>
    %c0_1 = arith.constant 0 : index
    %c0_2 = arith.constant 0 : index
    %1 = vector.load %arg2[%c0_1, %c0_2] : memref<16x512xbf16, #tpu.memory_space<vmem>>, vector<16x512xbf16>
    %cst = arith.constant dense<0.000000e+00> : vector<8x512xf32>
    %2 = tpu.matmul %0, %1, %cst {dimension_numbers = #tpu.dot_dimension_numbers<[1], [0], [0], [1], [0, 0, 1, 1], [], []>} : vector<8x16xbf16>, vector<16x512xbf16>, vector<8x512xf32> -> vector<8x512xf32>
    %c0_3 = arith.constant 0 : index
    %c0_4 = arith.constant 0 : index
    %3 = vector.load %arg3[%c0_3, %c0_4] : memref<1x512xf32, #tpu.memory_space<vmem>>, vector<1x512xf32>
    %4 = vector.broadcast %3 : vector<1x512xf32> to vector<8x512xf32>
    %5 = arith.addf %2, %4 : vector<8x512xf32>
    %cst_5 = arith.constant 0.000000e+00 : f32
    %6 = vector.broadcast %cst_5 : f32 to vector<8x512xf32>
    %7 = arith.maximumf %5, %6 : vector<8x512xf32>
    %8 = arith.truncf %7 : vector<8x512xf32> to vector<8x512xbf16>
    %c0_6 = arith.constant 0 : index
    %c0_7 = arith.constant 0 : index
    %9 = vector.load %arg4[%c0_6, %c0_7] : memref<512x384xbf16, #tpu.memory_space<vmem>>, vector<512x384xbf16>
    %cst_8 = arith.constant dense<0.000000e+00> : vector<8x384xf32>
    %10 = tpu.matmul %8, %9, %cst_8 {dimension_numbers = #tpu.dot_dimension_numbers<[1], [0], [0], [1], [0, 0, 1, 1], [], []>} : vector<8x512xbf16>, vector<512x384xbf16>, vector<8x384xf32> -> vector<8x384xf32>
    %c0_9 = arith.constant 0 : index
    %c0_10 = arith.constant 0 : index
    %11 = vector.load %arg5[%c0_9, %c0_10] : memref<1x384xf32, #tpu.memory_space<vmem>>, vector<1x384xf32>
    %12 = vector.broadcast %11 : vector<1x384xf32> to vector<8x384xf32>
    %13 = arith.addf %10, %12 : vector<8x384xf32>
    %cst_11 = arith.constant 0.000000e+00 : f32
    %14 = vector.broadcast %cst_11 : f32 to vector<8x384xf32>
    %15 = arith.maximumf %13, %14 : vector<8x384xf32>
    %c0_12 = arith.constant 0 : index
    %c0_13 = arith.constant 0 : index
    %16 = vector.load %arg6[%c0_12, %c0_13] : memref<384x128xf32, #tpu.memory_space<vmem>>, vector<384x128xf32>
    %cst_14 = arith.constant dense<0.000000e+00> : vector<8x128xf32>
    %17 = tpu.matmul %15, %16, %cst_14 {dimension_numbers = #tpu.dot_dimension_numbers<[1], [0], [0], [1], [0, 0, 1, 1], [], []>} : vector<8x384xf32>, vector<384x128xf32>, vector<8x128xf32> -> vector<8x128xf32>
    %c0_15 = arith.constant 0 : index
    %c0_16 = arith.constant 0 : index
    %18 = vector.load %arg7[%c0_15, %c0_16] : memref<1x128xf32, #tpu.memory_space<vmem>>, vector<1x128xf32>
    %19 = vector.broadcast %18 : vector<1x128xf32> to vector<8x128xf32>
    %20 = arith.addf %17, %19 : vector<8x128xf32>
    %21 = math.tanh %20 : vector<8x128xf32>
    %cst_17 = arith.constant 2.000000e+00 : f32
    %22 = vector.broadcast %cst_17 : f32 to vector<8x128xf32>
    %23 = arith.mulf %21, %22 : vector<8x128xf32>
    %c0_18 = arith.constant 0 : index
    %c0_19 = arith.constant 0 : index
    %24 = vector.load %arg8[%c0_18, %c0_19] : memref<8x128xf32, #tpu.memory_space<vmem>>, vector<8x128xf32>
    tpu.vector_store %arg8[%c0_18, %c0_19], %23 {strides = array<i32>} : memref<8x128xf32, #tpu.memory_space<vmem>>, vector<8x128xf32>,
    return
  }
  func.func @transform_0(%arg0: i32) -> (i32, i32) {
    %c0_i32 = arith.constant 0 : i32
    %c0_i32_0 = arith.constant 0 : i32
    return %arg0, %c0_i32 : i32, i32
  }
  func.func @transform_1(%arg0: i32) -> (i32, i32) {
    %c0_i32 = arith.constant 0 : i32
    %c0_i32_0 = arith.constant 0 : i32
    %c0_i32_1 = arith.constant 0 : i32
    return %c0_i32, %c0_i32_0 : i32, i32
  }
  func.func @transform_2(%arg0: i32) -> (i32, i32) {
    %c0_i32 = arith.constant 0 : i32
    %c0_i32_0 = arith.constant 0 : i32
    %c0_i32_1 = arith.constant 0 : i32
    return %c0_i32, %c0_i32_0 : i32, i32
  }
  func.func @transform_3(%arg0: i32) -> (i32, i32) {
    %c0_i32 = arith.constant 0 : i32
    %c0_i32_0 = arith.constant 0 : i32
    %c0_i32_1 = arith.constant 0 : i32
    return %c0_i32, %c0_i32_0 : i32, i32
  }
  func.func @transform_4(%arg0: i32) -> (i32, i32) {
    %c0_i32 = arith.constant 0 : i32
    %c0_i32_0 = arith.constant 0 : i32
    %c0_i32_1 = arith.constant 0 : i32
    return %c0_i32, %c0_i32_0 : i32, i32
  }
  func.func @transform_5(%arg0: i32) -> (i32, i32) {
    %c0_i32 = arith.constant 0 : i32
    %c0_i32_0 = arith.constant 0 : i32
    %c0_i32_1 = arith.constant 0 : i32
    return %c0_i32, %c0_i32_0 : i32, i32
  }
  func.func @transform_6(%arg0: i32) -> (i32, i32) {
    %c0_i32 = arith.constant 0 : i32
    %c0_i32_0 = arith.constant 0 : i32
    %c0_i32_1 = arith.constant 0 : i32
    return %c0_i32, %c0_i32_0 : i32, i32
  }
  func.func @transform_7(%arg0: i32) -> (i32, i32) {
    %c0_i32 = arith.constant 0 : i32
    %c0_i32_0 = arith.constant 0 : i32
    return %arg0, %c0_i32 : i32, i32
  }
}

</mosaic_0001>

<llo_original>
// kernel: tpu_custom_call.1
$region0: #{tpu_custom_call.1}
  #allocation0 [shape = 'u32[]', space=smem, size = 0x4, offset = 0x4, fixed_abs, tag = 'smem constant byte address 0x4 - core index']
  #allocation1 [shape = 'u32[144,128]{1,0:T(1,128)}', space=vmem, size = 0x12000, scoped, tag = 'internal scratch']
  %s0 = inlined_call_operand.hbm [shape: bf16[8,16], index: 0, kind: input, shape index: {}]
  %s1 = inlined_call_operand.hbm [shape: bf16[16,512], index: 1, kind: input, shape index: {}]
  %s2 = inlined_call_operand.vmem [shape: f32[1,512], index: 2, kind: input, shape index: {}]
  %s3 = inlined_call_operand.hbm [shape: bf16[512,384], index: 3, kind: input, shape index: {}]
  %s4 = inlined_call_operand.vmem [shape: f32[1,384], index: 4, kind: input, shape index: {}]
  %s5 = inlined_call_operand.hbm [shape: f32[384,128], index: 5, kind: input, shape index: {}]
  %s6 = inlined_call_operand.vmem [shape: f32[1,128], index: 6, kind: input, shape index: {}]
  %s7 = inlined_call_operand.hbm [shape: f32[8,128], index: 7, kind: output, shape index: {}]
  %s8 = sld [smem:[#allocation0]]
  $region54: #{tpu_custom_call.1} parent=0
    _
  %s10 = ssub.s32 1, %s8
  %s11 = scalar_select 0, %s10, %s8
  $region1: #{tpu_custom_call.1} parent=0
    #allocation2 [shape = 'u8[2048]{0}', space=vmem, size = 0x800, scoped, tag = 'input window, operand 0, single buffered']
    #allocation3 [shape = 's32[1]{0}', space=sflag, size = 0x4, scoped, tag = 'scoped memory for tpu_custom_call.1']
    #allocation4 [shape = 's32[1]{0}', space=sflag, size = 0x4, scoped, tag = 'scoped memory for tpu_custom_call.1']
    #allocation5 [shape = 'u8[16384]{0}', space=vmem, size = 0x4000, scoped, tag = 'input window, operand 1, single buffered']
    #allocation6 [shape = 's32[1]{0}', space=sflag, size = 0x4, scoped, tag = 'scoped memory for tpu_custom_call.1']
    #allocation7 [shape = 'u8[393216]{0}', space=vmem, size = 0x60000, scoped, tag = 'input window, operand 3, single buffered']
    #allocation8 [shape = 'u8[196608]{0}', space=vmem, size = 0x30000, scoped, tag = 'input window, operand 5, single buffered']
    #allocation9 [shape = 's32[1]{0}', space=sflag, size = 0x4, scoped, tag = 'scoped memory for tpu_custom_call.1']
    #allocation10 [shape = 'u8[4096]{0}', space=vmem, size = 0x1000, scoped, tag = 'output window, operand 0, single buffered']
    %12 = vsyncpa [#allocation3], 0
    %13 = vsyncpa [#allocation6], 0
    %14 = vsyncpa [#allocation9], 0
    %15 = vsyncpa [#allocation4], 0
    // Predicated region
    $region2: #{tpu_custom_call.1} parent=1 // pred_check
      _
    $region3: #{tpu_custom_call.1} parent=1 // pred_check_branch
      %17 = sbr.rel (0) target = $region5
    $region4: #{tpu_custom_call.1} parent=1 // pred_region
      %s19 = ssub.s32 64, 64
      %20 = vsyncadd [#allocation3], %s19
      %s22 = sshll.u32 [#allocation2], 4
      %s23 = int_to_ptr.vmem [resolvable:$true] %s22
      %25 = dma.hbm_to_vmem [thread:$0]  %s0, 64, %s23, [#allocation3]
    $region5: #{tpu_custom_call.1} parent=1 // pred_fallthru
      _
    // Predicated region
    $region6: #{tpu_custom_call.1} parent=1 // pred_check
      _
    $region7: #{tpu_custom_call.1} parent=1 // pred_check_branch
      %27 = sbr.rel (0) target = $region9
    $region8: #{tpu_custom_call.1} parent=1 // pred_region
      %s29 = ssub.s32 512, 512
      %30 = vsyncadd [#allocation6], %s29
      %s31 = sshll.u32 [#allocation5], 4
      %s32 = int_to_ptr.vmem [resolvable:$true] %s31
      %37 = dma.hbm_to_vmem [thread:$0]  %s1, 512, %s32, [#allocation6], 256, 256, 16
    $region9: #{tpu_custom_call.1} parent=1 // pred_fallthru
      _
    // Predicated region
    $region10: #{tpu_custom_call.1} parent=1 // pred_check
      _
    $region11: #{tpu_custom_call.1} parent=1 // pred_check_branch
      %39 = sbr.rel (0) target = $region13
    $region12: #{tpu_custom_call.1} parent=1 // pred_region
      _
    $region13: #{tpu_custom_call.1} parent=1 // pred_fallthru
      _
    // Predicated region
    $region14: #{tpu_custom_call.1} parent=1 // pred_check
      _
    $region15: #{tpu_custom_call.1} parent=1 // pred_check_branch
      %41 = sbr.rel (0) target = $region17
    $region16: #{tpu_custom_call.1} parent=1 // pred_region
      %s43 = ssub.s32 12288, 12288
      %44 = vsyncadd [#allocation6], %s43
      %s45 = sshll.u32 [#allocation7], 4
      %s46 = int_to_ptr.vmem [resolvable:$true] %s45
      %51 = dma.hbm_to_vmem [thread:$0]  %s3, 12288, %s46, [#allocation6], 192, 192, 12
    $region17: #{tpu_custom_call.1} parent=1 // pred_fallthru
      _
    // Predicated region
    $region18: #{tpu_custom_call.1} parent=1 // pred_check
      _
    $region19: #{tpu_custom_call.1} parent=1 // pred_check_branch
      %53 = sbr.rel (0) target = $region21
    $region20: #{tpu_custom_call.1} parent=1 // pred_region
      _
    $region21: #{tpu_custom_call.1} parent=1 // pred_fallthru
      _
    // Predicated region
    $region22: #{tpu_custom_call.1} parent=1 // pred_check
      _
    $region23: #{tpu_custom_call.1} parent=1 // pred_check_branch
      %55 = sbr.rel (0) target = $region25
    $region24: #{tpu_custom_call.1} parent=1 // pred_region
      %s57 = ssub.s32 6144, 6144
      %58 = vsyncadd [#allocation9], %s57
      %s59 = sshll.u32 [#allocation8], 4
      %s60 = int_to_ptr.vmem [resolvable:$true] %s59
      %65 = dma.hbm_to_vmem [thread:$0]  %s5, 6144, %s60, [#allocation9], 128, 128, 8
    $region25: #{tpu_custom_call.1} parent=1 // pred_fallthru
      _
    // Predicated region
    $region26: #{tpu_custom_call.1} parent=1 // pred_check
      _
    $region27: #{tpu_custom_call.1} parent=1 // pred_check_branch
      %67 = sbr.rel (0) target = $region29
    $region28: #{tpu_custom_call.1} parent=1 // pred_region
      _
    $region29: #{tpu_custom_call.1} parent=1 // pred_fallthru
      _
    // Predicated region
    $region30: #{tpu_custom_call.1} parent=1 // pred_check
      _
    $region31: #{tpu_custom_call.1} parent=1 // pred_check_branch
      %69 = sbr.rel (0) target = $region33
    $region32: #{tpu_custom_call.1} parent=1 // pred_region
      %70 = dma.done [#allocation3], 64
    $region33: #{tpu_custom_call.1} parent=1 // pred_fallthru
      _
    // Predicated region
    $region34: #{tpu_custom_call.1} parent=1 // pred_check
      _
    $region35: #{tpu_custom_call.1} parent=1 // pred_check_branch
      %72 = sbr.rel (0) target = $region37
    $region36: #{tpu_custom_call.1} parent=1 // pred_region
      %73 = dma.done [#allocation6], 512
    $region37: #{tpu_custom_call.1} parent=1 // pred_fallthru
      _
    // Predicated region
    $region38: #{tpu_custom_call.1} parent=1 // pred_check
      _
    $region39: #{tpu_custom_call.1} parent=1 // pred_check_branch
      %75 = sbr.rel (0) target = $region41
    $region40: #{tpu_custom_call.1} parent=1 // pred_region
      %76 = dma.done [#allocation6], 12288
    $region41: #{tpu_custom_call.1} parent=1 // pred_fallthru
      _
    // Predicated region
    $region42: #{tpu_custom_call.1} parent=1 // pred_check
      _
    $region43: #{tpu_custom_call.1} parent=1 // pred_check_branch
      %78 = sbr.rel (0) target = $region45
    $region44: #{tpu_custom_call.1} parent=1 // pred_region
      %79 = dma.done [#allocation9], 6144
    $region45: #{tpu_custom_call.1} parent=1 // pred_fallthru
      _
    %v81 = vld [vmem:[#allocation2] sm:$0xf]
    %v82 = vld [vmem:[#allocation5] sm:$0xff]
    %v83 = vld [vmem:[#allocation5 + $0x8] sm:$0xff]
    %v84 = vld [vmem:[#allocation5 + $0x10] sm:$0xff]
    %v85 = vld [vmem:[#allocation5 + $0x18] sm:$0xff]
    %v86 = vld [vmem:[%s2] sm:$0xf]
    %v88 = vlaneseq
    %v89 = vshrl.u32 %v88, 7
    %v90 = vsub.s32 0, %v89
    %v91 = vrot.slane %v86, %v90
    %v92 = vlaneseq
    %v93 = vshrl.u32 %v92, 7
    %v94 = vsub.s32 1, %v93
    %v95 = vrot.slane %v86, %v94
    %v96 = vlaneseq
    %v97 = vshrl.u32 %v96, 7
    %v98 = vsub.s32 2, %v97
    %v99 = vrot.slane %v86, %v98
    %v100 = vlaneseq
    %v101 = vshrl.u32 %v100, 7
    %v102 = vsub.s32 3, %v101
    %v103 = vrot.slane %v86, %v102
    %v112 = vunpack.c.l.b16 %v82
    %v113 = vunpack.c.h.b16 %v82
    %v114 = vunpack.c.l.b16 %v83
    %v115 = vunpack.c.h.b16 %v83
    %v116 = vunpack.c.l.b16 %v84
    %v117 = vunpack.c.h.b16 %v84
    %v118 = vunpack.c.l.b16 %v85
    %v119 = vunpack.c.h.b16 %v85
    %v120 = vpack.c.b16 %v116, %v112
    %v121 = vpack.c.b16 %v117, %v113
    %v122 = vpack.c.b16 %v118, %v114
    %v123 = vpack.c.b16 %v119, %v115
    %vm128 = vcmask 130048
    %v130 = vsel %vm128, %v81, 0
    %132 = vmatprep.subr.bf16.mxu0 %v121
    %133 = vmatpush1.bf16.msra.mxu0 %v120
    %134 = vmatprep.subr.bf16.mxu0 0
    %135 = vmatpush1.bf16.msra.mxu0 0
    %136 = vmatprep.subr.bf16.mxu0 0
    %137 = vmatpush1.bf16.msra.mxu0 0
    %138 = vmatprep.subr.bf16.mxu0 0
    %139 = vmatpush1.bf16.msra.mxu0 0
    %140 = vmatprep.subr.bf16.mxu0 0
    %141 = vmatpush1.bf16.msra.mxu0 0
    %142 = vmatprep.subr.bf16.mxu0 0
    %143 = vmatpush1.bf16.msra.mxu0 0
    %144 = vmatprep.subr.bf16.mxu0 0
    %145 = vmatpush1.bf16.msra.mxu0 0
    %146 = vmatprep.subr.bf16.mxu0 0
    %147 = vmatpush1.bf16.msra.mxu0 0
    %148 = vmatprep.subr.bf16.mxu0 0
    %149 = vmatpush1.bf16.msra.mxu0 0
    %150 = vmatprep.subr.bf16.mxu0 0
    %151 = vmatpush1.bf16.msra.mxu0 0
    %152 = vmatprep.subr.bf16.mxu0 0
    %153 = vmatpush1.bf16.msra.mxu0 0
    %154 = vmatprep.subr.bf16.mxu0 0
    %155 = vmatpush1.bf16.msra.mxu0 0
    %156 = vmatprep.subr.bf16.mxu0 0
    %157 = vmatpush1.bf16.msra.mxu0 0
    %158 = vmatprep.subr.bf16.mxu0 0
    %159 = vmatpush1.bf16.msra.mxu0 0
    %160 = vmatprep.subr.bf16.mxu0 0
    %161 = vmatpush1.bf16.msra.mxu0 0
    %162 = vmatprep.subr.bf16.mxu0 0
    %163 = vmatpush1.bf16.msra.mxu0 0
    %164 = vmatprep.mubr.bf16.mxu0 0
    %165 = vmatmul.mubr.bf16.gmra.mrb[0].mxu0 %v130
    %v166 = vpop.f32.mrb[0].mxu0
    %v167 = vadd.f32 %v91, %v166
    %v168 = vpop.f32.mrb[0].mxu0
    %v169 = vadd.f32 %v95, %v168
    %v170 = vpop.f32.mrb[0].mxu0
    %v171 = vpop.f32.mrb[0].mxu0
    %172 = vdwg.mxu0
    %173 = vmatprep.subr.bf16.mxu0 %v123
    %174 = vmatpush1.bf16.msra.mxu0 %v122
    %175 = vmatprep.subr.bf16.mxu0 0
    %176 = vmatpush1.bf16.msra.mxu0 0
    %177 = vmatprep.subr.bf16.mxu0 0
    %178 = vmatpush1.bf16.msra.mxu0 0
    %179 = vmatprep.subr.bf16.mxu0 0
    %180 = vmatpush1.bf16.msra.mxu0 0
    %181 = vmatprep.subr.bf16.mxu0 0
    %182 = vmatpush1.bf16.msra.mxu0 0
    %183 = vmatprep.subr.bf16.mxu0 0
    %184 = vmatpush1.bf16.msra.mxu0 0
    %185 = vmatprep.subr.bf16.mxu0 0
    %186 = vmatpush1.bf16.msra.mxu0 0
    %187 = vmatprep.subr.bf16.mxu0 0
    %188 = vmatpush1.bf16.msra.mxu0 0
    %189 = vmatprep.subr.bf16.mxu0 0
    %190 = vmatpush1.bf16.msra.mxu0 0
    %191 = vmatprep.subr.bf16.mxu0 0
    %192 = vmatpush1.bf16.msra.mxu0 0
    %193 = vmatprep.subr.bf16.mxu0 0
    %194 = vmatpush1.bf16.msra.mxu0 0
    %195 = vmatprep.subr.bf16.mxu0 0
    %196 = vmatpush1.bf16.msra.mxu0 0
    %197 = vmatprep.subr.bf16.mxu0 0
    %198 = vmatpush1.bf16.msra.mxu0 0
    %199 = vmatprep.subr.bf16.mxu0 0
    %200 = vmatpush1.bf16.msra.mxu0 0
    %201 = vmatprep.subr.bf16.mxu0 0
    %202 = vmatpush1.bf16.msra.mxu0 0
    %203 = vmatprep.subr.bf16.mxu0 0
    %204 = vmatpush1.bf16.msra.mxu0 0
    %205 = vmatprep.mubr.bf16.mxu0 0
    %206 = vmatmul.mubr.bf16.gmra.mrb[0].mxu0 %v130
    %v207 = vpop.f32.mrb[0].mxu0
    %v208 = vadd.f32 %v99, %v207
    %v209 = vpop.f32.mrb[0].mxu0
    %v210 = vadd.f32 %v103, %v209
    %v211 = vpop.f32.mrb[0].mxu0
    %v212 = vpop.f32.mrb[0].mxu0
    %213 = vdwg.mxu0
    %v214 = vmax.f32 %v167, 0.0
    %v215 = vmax.f32 %v169, 0.0
    %v216 = vmax.f32 %v208, 0.0
    %v217 = vmax.f32 %v210, 0.0
    %v218 = vpack.c.bf16 %v214, %v214
    %v219 = vpack.c.bf16 %v215, %v215
    %v220 = vpack.c.bf16 %v216, %v216
    %v221 = vpack.c.bf16 %v217, %v217
    %v222 = vld [vmem:[#allocation7] sm:$0xff]
    %v223 = vld [vmem:[#allocation7 + $0x8] sm:$0xf]
    %v224 = vld [vmem:[#allocation7 + $0xc] sm:$0xff]
    %v225 = vld [vmem:[#allocation7 + $0x14] sm:$0xf]
    %v226 = vld [vmem:[#allocation7 + $0x18] sm:$0xff]
    %v227 = vld [vmem:[#allocation7 + $0x20] sm:$0xf]
    %v228 = vld [vmem:[#allocation7 + $0x24] sm:$0xff]
    %v229 = vld [vmem:[#allocation7 + $0x2c] sm:$0xf]
    %v230 = vld [vmem:[#allocation7 + $0x30] sm:$0xff]
    %v231 = vld [vmem:[#allocation7 + $0x38] sm:$0xf]
    %v232 = vld [vmem:[#allocation7 + $0x3c] sm:$0xff]
    %v233 = vld [vmem:[#allocation7 + $0x44] sm:$0xf]
    %v234 = vld [vmem:[#allocation7 + $0x48] sm:$0xff]
    %v235 = vld [vmem:[#allocation7 + $0x50] sm:$0xf]
    %v236 = vld [vmem:[#allocation7 + $0x54] sm:$0xff]
    %v237 = vld [vmem:[#allocation7 + $0x5c] sm:$0xf]
    %v238 = vld [vmem:[#allocation7 + $0x60] sm:$0xff]
    %v239 = vld [vmem:[#allocation7 + $0x68] sm:$0xf]
    %v240 = vld [vmem:[#allocation7 + $0x6c] sm:$0xff]
    %v241 = vld [vmem:[#allocation7 + $0x74] sm:$0xf]
    %v242 = vld [vmem:[#allocation7 + $0x78] sm:$0xff]
    %v243 = vld [vmem:[#allocation7 + $0x80] sm:$0xf]
    %v244 = vld [vmem:[#allocation7 + $0x84] sm:$0xff]
    %v245 = vld [vmem:[#allocation7 + $0x8c] sm:$0xf]
    %v246 = vld [vmem:[#allocation7 + $0x90] sm:$0xff]
    %v247 = vld [vmem:[#allocation7 + $0x98] sm:$0xf]
    %v248 = vld [vmem:[#allocation7 + $0x9c] sm:$0xff]
    %v249 = vld [vmem:[#allocation7 + $0xa4] sm:$0xf]
    %v250 = vld [vmem:[#allocation7 + $0xa8] sm:$0xff]
    %v251 = vld [vmem:[#allocation7 + $0xb0] sm:$0xf]
    %v252 = vld [vmem:[#allocation7 + $0xb4] sm:$0xff]
    %v253 = vld [vmem:[#allocation7 + $0xbc] sm:$0xf]
    %v254 = vld [vmem:[#allocation7 + $0xc0] sm:$0xff]
    %v255 = vld [vmem:[#allocation7 + $0xc8] sm:$0xf]
    %v256 = vld [vmem:[#allocation7 + $0xcc] sm:$0xff]
    %v257 = vld [vmem:[#allocation7 + $0xd4] sm:$0xf]
    %v258 = vld [vmem:[#allocation7 + $0xd8] sm:$0xff]
    %v259 = vld [vmem:[#allocation7 + $0xe0] sm:$0xf]
    %v260 = vld [vmem:[#allocation7 + $0xe4] sm:$0xff]
    %v261 = vld [vmem:[#allocation7 + $0xec] sm:$0xf]
    %v262 = vld [vmem:[#allocation7 + $0xf0] sm:$0xff]
    %v263 = vld [vmem:[#allocation7 + $0xf8] sm:$0xf]
    %v264 = vld [vmem:[#allocation7 + $0xfc] sm:$0xff]
    %v265 = vld [vmem:[#allocation7 + $0x104] sm:$0xf]
    %v266 = vld [vmem:[#allocation7 + $0x108] sm:$0xff]
    %v267 = vld [vmem:[#allocation7 + $0x110] sm:$0xf]
    %v268 = vld [vmem:[#allocation7 + $0x114] sm:$0xff]
    %v269 = vld [vmem:[#allocation7 + $0x11c] sm:$0xf]
    %v270 = vld [vmem:[#allocation7 + $0x120] sm:$0xff]
    %v271 = vld [vmem:[#allocation7 + $0x128] sm:$0xf]
    %v272 = vld [vmem:[#allocation7 + $0x12c] sm:$0xff]
    %v273 = vld [vmem:[#allocation7 + $0x134] sm:$0xf]
    %v274 = vld [vmem:[#allocation7 + $0x138] sm:$0xff]
    %v275 = vld [vmem:[#allocation7 + $0x140] sm:$0xf]
    %v276 = vld [vmem:[#allocation7 + $0x144] sm:$0xff]
    %v277 = vld [vmem:[#allocation7 + $0x14c] sm:$0xf]
    %v278 = vld [vmem:[#allocation7 + $0x150] sm:$0xff]
    %v279 = vld [vmem:[#allocation7 + $0x158] sm:$0xf]
    %v280 = vld [vmem:[#allocation7 + $0x15c] sm:$0xff]
    %v281 = vld [vmem:[#allocation7 + $0x164] sm:$0xf]
    %v282 = vld [vmem:[#allocation7 + $0x168] sm:$0xff]
    %v283 = vld [vmem:[#allocation7 + $0x170] sm:$0xf]
    %v284 = vld [vmem:[#allocation7 + $0x174] sm:$0xff]
    %v285 = vld [vmem:[#allocation7 + $0x17c] sm:$0xf]
    %v286 = vld [vmem:[#allocation7 + $0x180] sm:$0xff]
    %v287 = vld [vmem:[#allocation7 + $0x188] sm:$0xf]
    %v288 = vld [vmem:[#allocation7 + $0x18c] sm:$0xff]
    %v289 = vld [vmem:[#allocation7 + $0x194] sm:$0xf]
    %v290 = vld [vmem:[#allocation7 + $0x198] sm:$0xff]
    %v291 = vld [vmem:[#allocation7 + $0x1a0] sm:$0xf]
    %v292 = vld [vmem:[#allocation7 + $0x1a4] sm:$0xff]
    %v293 = vld [vmem:[#allocation7 + $0x1ac] sm:$0xf]
    %v294 = vld [vmem:[#allocation7 + $0x1b0] sm:$0xff]
    %v295 = vld [vmem:[#allocation7 + $0x1b8] sm:$0xf]
    %v296 = vld [vmem:[#allocation7 + $0x1bc] sm:$0xff]
    %v297 = vld [vmem:[#allocation7 + $0x1c4] sm:$0xf]
    %v298 = vld [vmem:[#allocation7 + $0x1c8] sm:$0xff]
    %v299 = vld [vmem:[#allocation7 + $0x1d0] sm:$0xf]
    %v300 = vld [vmem:[#allocation7 + $0x1d4] sm:$0xff]
    %v301 = vld [vmem:[#allocation7 + $0x1dc] sm:$0xf]
    %v302 = vld [vmem:[#allocation7 + $0x1e0] sm:$0xff]
    %v303 = vld [vmem:[#allocation7 + $0x1e8] sm:$0xf]
    %v304 = vld [vmem:[#allocation7 + $0x1ec] sm:$0xff]
    %v305 = vld [vmem:[#allocation7 + $0x1f4] sm:$0xf]
    %v306 = vld [vmem:[#allocation7 + $0x1f8] sm:$0xff]
    %v307 = vld [vmem:[#allocation7 + $0x200] sm:$0xf]
    %v308 = vld [vmem:[#allocation7 + $0x204] sm:$0xff]
    %v309 = vld [vmem:[#allocation7 + $0x20c] sm:$0xf]
    %v310 = vld [vmem:[#allocation7 + $0x210] sm:$0xff]
    %v311 = vld [vmem:[#allocation7 + $0x218] sm:$0xf]
    %v312 = vld [vmem:[#allocation7 + $0x21c] sm:$0xff]
    %v313 = vld [vmem:[#allocation7 + $0x224] sm:$0xf]
    %v314 = vld [vmem:[#allocation7 + $0x228] sm:$0xff]
    %v315 = vld [vmem:[#allocation7 + $0x230] sm:$0xf]
    %v316 = vld [vmem:[#allocation7 + $0x234] sm:$0xff]
    %v317 = vld [vmem:[#allocation7 + $0x23c] sm:$0xf]
    %v318 = vld [vmem:[#allocation7 + $0x240] sm:$0xff]
    %v319 = vld [vmem:[#allocation7 + $0x248] sm:$0xf]
    %v320 = vld [vmem:[#allocation7 + $0x24c] sm:$0xff]
    %v321 = vld [vmem:[#allocation7 + $0x254] sm:$0xf]
    %v322 = vld [vmem:[#allocation7 + $0x258] sm:$0xff]
    %v323 = vld [vmem:[#allocation7 + $0x260] sm:$0xf]
    %v324 = vld [vmem:[#allocation7 + $0x264] sm:$0xff]
    %v325 = vld [vmem:[#allocation7 + $0x26c] sm:$0xf]
    %v326 = vld [vmem:[#allocation7 + $0x270] sm:$0xff]
    %v327 = vld [vmem:[#allocation7 + $0x278] sm:$0xf]
    %v328 = vld [vmem:[#allocation7 + $0x27c] sm:$0xff]
    %v329 = vld [vmem:[#allocation7 + $0x284] sm:$0xf]
    %v330 = vld [vmem:[#allocation7 + $0x288] sm:$0xff]
    %v331 = vld [vmem:[#allocation7 + $0x290] sm:$0xf]
    %v332 = vld [vmem:[#allocation7 + $0x294] sm:$0xff]
    %v333 = vld [vmem:[#allocation7 + $0x29c] sm:$0xf]
    %v334 = vld [vmem:[#allocation7 + $0x2a0] sm:$0xff]
    %v335 = vld [vmem:[#allocation7 + $0x2a8] sm:$0xf]
    %v336 = vld [vmem:[#allocation7 + $0x2ac] sm:$0xff]
    %v337 = vld [vmem:[#allocation7 + $0x2b4] sm:$0xf]
    %v338 = vld [vmem:[#allocation7 + $0x2b8] sm:$0xff]
    %v339 = vld [vmem:[#allocation7 + $0x2c0] sm:$0xf]
    %v340 = vld [vmem:[#allocation7 + $0x2c4] sm:$0xff]
    %v341 = vld [vmem:[#allocation7 + $0x2cc] sm:$0xf]
    %v342 = vld [vmem:[#allocation7 + $0x2d0] sm:$0xff]
    %v343 = vld [vmem:[#allocation7 + $0x2d8] sm:$0xf]
    %v344 = vld [vmem:[#allocation7 + $0x2dc] sm:$0xff]
    %v345 = vld [vmem:[#allocation7 + $0x2e4] sm:$0xf]
    %v346 = vld [vmem:[#allocation7 + $0x2e8] sm:$0xff]
    %v347 = vld [vmem:[#allocation7 + $0x2f0] sm:$0xf]
    %v348 = vld [vmem:[#allocation7 + $0x2f4] sm:$0xff]
    %v349 = vld [vmem:[#allocation7 + $0x2fc] sm:$0xf]
    %v350 = vld [vmem:[%s4] sm:$0x7]
    %v352 = vlaneseq
    %v353 = vshrl.u32 %v352, 7
    %v354 = vsub.s32 0, %v353
    %v355 = vrot.slane %v350, %v354
    %v356 = vlaneseq
    %v357 = vshrl.u32 %v356, 7
    %v358 = vsub.s32 1, %v357
    %v359 = vrot.slane %v350, %v358
    %v360 = vlaneseq
    %v361 = vshrl.u32 %v360, 7
    %v362 = vsub.s32 2, %v361
    %v363 = vrot.slane %v350, %v362
    %v495 = vunpack.c.l.b16 %v222
    %v496 = vunpack.c.h.b16 %v222
    %v497 = vunpack.c.l.b16 %v223
    %v498 = vunpack.c.l.b16 %v224
    %v499 = vunpack.c.h.b16 %v224
    %v500 = vunpack.c.l.b16 %v225
    %v501 = vunpack.c.l.b16 %v226
    %v502 = vunpack.c.h.b16 %v226
    %v503 = vunpack.c.l.b16 %v227
    %v504 = vunpack.c.l.b16 %v228
    %v505 = vunpack.c.h.b16 %v228
    %v506 = vunpack.c.l.b16 %v229
    %v507 = vunpack.c.l.b16 %v230
    %v508 = vunpack.c.h.b16 %v230
    %v509 = vunpack.c.l.b16 %v231
    %v510 = vunpack.c.l.b16 %v232
    %v511 = vunpack.c.h.b16 %v232
    %v512 = vunpack.c.l.b16 %v233
    %v513 = vunpack.c.l.b16 %v234
    %v514 = vunpack.c.h.b16 %v234
    %v515 = vunpack.c.l.b16 %v235
    %v516 = vunpack.c.l.b16 %v236
    %v517 = vunpack.c.h.b16 %v236
    %v518 = vunpack.c.l.b16 %v237
    %v519 = vunpack.c.l.b16 %v238
    %v520 = vunpack.c.h.b16 %v238
    %v521 = vunpack.c.l.b16 %v239
    %v522 = vunpack.c.l.b16 %v240
    %v523 = vunpack.c.h.b16 %v240
    %v524 = vunpack.c.l.b16 %v241
    %v525 = vunpack.c.l.b16 %v242
    %v526 = vunpack.c.h.b16 %v242
    %v527 = vunpack.c.l.b16 %v243
    %v528 = vunpack.c.l.b16 %v244
    %v529 = vunpack.c.h.b16 %v244
    %v530 = vunpack.c.l.b16 %v245
    %v531 = vunpack.c.l.b16 %v246
    %v532 = vunpack.c.h.b16 %v246
    %v533 = vunpack.c.l.b16 %v247
    %v534 = vunpack.c.l.b16 %v248
    %v535 = vunpack.c.h.b16 %v248
    %v536 = vunpack.c.l.b16 %v249
    %v537 = vunpack.c.l.b16 %v250
    %v538 = vunpack.c.h.b16 %v250
    %v539 = vunpack.c.l.b16 %v251
    %v540 = vunpack.c.l.b16 %v252
    %v541 = vunpack.c.h.b16 %v252
    %v542 = vunpack.c.l.b16 %v253
    %v543 = vunpack.c.l.b16 %v254
    %v544 = vunpack.c.h.b16 %v254
    %v545 = vunpack.c.l.b16 %v255
    %v546 = vunpack.c.l.b16 %v256
    %v547 = vunpack.c.h.b16 %v256
    %v548 = vunpack.c.l.b16 %v257
    %v549 = vunpack.c.l.b16 %v258
    %v550 = vunpack.c.h.b16 %v258
    %v551 = vunpack.c.l.b16 %v259
    %v552 = vunpack.c.l.b16 %v260
    %v553 = vunpack.c.h.b16 %v260
    %v554 = vunpack.c.l.b16 %v261
    %v555 = vunpack.c.l.b16 %v262
    %v556 = vunpack.c.h.b16 %v262
    %v557 = vunpack.c.l.b16 %v263
    %v558 = vunpack.c.l.b16 %v264
    %v559 = vunpack.c.h.b16 %v264
    %v560 = vunpack.c.l.b16 %v265
    %v561 = vunpack.c.l.b16 %v266
    %v562 = vunpack.c.h.b16 %v266
    %v563 = vunpack.c.l.b16 %v267
    %v564 = vunpack.c.l.b16 %v268
    %v565 = vunpack.c.h.b16 %v268
    %v566 = vunpack.c.l.b16 %v269
    %v567 = vunpack.c.l.b16 %v270
    %v568 = vunpack.c.h.b16 %v270
    %v569 = vunpack.c.l.b16 %v271
    %v570 = vunpack.c.l.b16 %v272
    %v571 = vunpack.c.h.b16 %v272
    %v572 = vunpack.c.l.b16 %v273
    %v573 = vunpack.c.l.b16 %v274
    %v574 = vunpack.c.h.b16 %v274
    %v575 = vunpack.c.l.b16 %v275
    %v576 = vunpack.c.l.b16 %v276
    %v577 = vunpack.c.h.b16 %v276
    %v578 = vunpack.c.l.b16 %v277
    %v579 = vunpack.c.l.b16 %v278
    %v580 = vunpack.c.h.b16 %v278
    %v581 = vunpack.c.l.b16 %v279
    %v582 = vunpack.c.l.b16 %v280
    %v583 = vunpack.c.h.b16 %v280
    %v584 = vunpack.c.l.b16 %v281
    %v585 = vunpack.c.l.b16 %v282
    %v586 = vunpack.c.h.b16 %v282
    %v587 = vunpack.c.l.b16 %v283
    %v588 = vunpack.c.l.b16 %v284
    %v589 = vunpack.c.h.b16 %v284
    %v590 = vunpack.c.l.b16 %v285
    %v591 = vunpack.c.l.b16 %v286
    %v592 = vunpack.c.h.b16 %v286
    %v593 = vunpack.c.l.b16 %v287
    %v594 = vunpack.c.l.b16 %v288
    %v595 = vunpack.c.h.b16 %v288
    %v596 = vunpack.c.l.b16 %v289
    %v597 = vunpack.c.l.b16 %v290
    %v598 = vunpack.c.h.b16 %v290
    %v599 = vunpack.c.l.b16 %v291
    %v600 = vunpack.c.l.b16 %v292
    %v601 = vunpack.c.h.b16 %v292
    %v602 = vunpack.c.l.b16 %v293
    %v603 = vunpack.c.l.b16 %v294
    %v604 = vunpack.c.h.b16 %v294
    %v605 = vunpack.c.l.b16 %v295
    %v606 = vunpack.c.l.b16 %v296
    %v607 = vunpack.c.h.b16 %v296
    %v608 = vunpack.c.l.b16 %v297
    %v609 = vunpack.c.l.b16 %v298
    %v610 = vunpack.c.h.b16 %v298
    %v611 = vunpack.c.l.b16 %v299
    %v612 = vunpack.c.l.b16 %v300
    %v613 = vunpack.c.h.b16 %v300
    %v614 = vunpack.c.l.b16 %v301
    %v615 = vunpack.c.l.b16 %v302
    %v616 = vunpack.c.h.b16 %v302
    %v617 = vunpack.c.l.b16 %v303
    %v618 = vunpack.c.l.b16 %v304
    %v619 = vunpack.c.h.b16 %v304
    %v620 = vunpack.c.l.b16 %v305
    %v621 = vunpack.c.l.b16 %v306
    %v622 = vunpack.c.h.b16 %v306
    %v623 = vunpack.c.l.b16 %v307
    %v624 = vunpack.c.l.b16 %v308
    %v625 = vunpack.c.h.b16 %v308
    %v626 = vunpack.c.l.b16 %v309
    %v627 = vunpack.c.l.b16 %v310
    %v628 = vunpack.c.h.b16 %v310
    %v629 = vunpack.c.l.b16 %v311
    %v630 = vunpack.c.l.b16 %v312
    %v631 = vunpack.c.h.b16 %v312
    %v632 = vunpack.c.l.b16 %v313
    %v633 = vunpack.c.l.b16 %v314
    %v634 = vunpack.c.h.b16 %v314
    %v635 = vunpack.c.l.b16 %v315
    %v636 = vunpack.c.l.b16 %v316
    %v637 = vunpack.c.h.b16 %v316
    %v638 = vunpack.c.l.b16 %v317
    %v639 = vunpack.c.l.b16 %v318
    %v640 = vunpack.c.h.b16 %v318
    %v641 = vunpack.c.l.b16 %v319
    %v642 = vunpack.c.l.b16 %v320
    %v643 = vunpack.c.h.b16 %v320
    %v644 = vunpack.c.l.b16 %v321
    %v645 = vunpack.c.l.b16 %v322
    %v646 = vunpack.c.h.b16 %v322
    %v647 = vunpack.c.l.b16 %v323
    %v648 = vunpack.c.l.b16 %v324
    %v649 = vunpack.c.h.b16 %v324
    %v650 = vunpack.c.l.b16 %v325
    %v651 = vunpack.c.l.b16 %v326
    %v652 = vunpack.c.h.b16 %v326
    %v653 = vunpack.c.l.b16 %v327
    %v654 = vunpack.c.l.b16 %v328
    %v655 = vunpack.c.h.b16 %v328
    %v656 = vunpack.c.l.b16 %v329
    %v657 = vunpack.c.l.b16 %v330
    %v658 = vunpack.c.h.b16 %v330
    %v659 = vunpack.c.l.b16 %v331
    %v660 = vunpack.c.l.b16 %v332
    %v661 = vunpack.c.h.b16 %v332
    %v662 = vunpack.c.l.b16 %v333
    %v663 = vunpack.c.l.b16 %v334
    %v664 = vunpack.c.h.b16 %v334
    %v665 = vunpack.c.l.b16 %v335
    %v666 = vunpack.c.l.b16 %v336
    %v667 = vunpack.c.h.b16 %v336
    %v668 = vunpack.c.l.b16 %v337
    %v669 = vunpack.c.l.b16 %v338
    %v670 = vunpack.c.h.b16 %v338
    %v671 = vunpack.c.l.b16 %v339
    %v672 = vunpack.c.l.b16 %v340
    %v673 = vunpack.c.h.b16 %v340
    %v674 = vunpack.c.l.b16 %v341
    %v675 = vunpack.c.l.b16 %v342
    %v676 = vunpack.c.h.b16 %v342
    %v677 = vunpack.c.l.b16 %v343
    %v678 = vunpack.c.l.b16 %v344
    %v679 = vunpack.c.h.b16 %v344
    %v680 = vunpack.c.l.b16 %v345
    %v681 = vunpack.c.l.b16 %v346
    %v682 = vunpack.c.h.b16 %v346
    %v683 = vunpack.c.l.b16 %v347
    %v684 = vunpack.c.l.b16 %v348
    %v685 = vunpack.c.h.b16 %v348
    %v686 = vunpack.c.l.b16 %v349
    %v687 = vpack.c.b16 %v498, %v495
    %v688 = vpack.c.b16 %v499, %v496
    %v689 = vpack.c.b16 %v500, %v497
    %v690 = vpack.c.b16 %v504, %v501
    %v691 = vpack.c.b16 %v505, %v502
    %v692 = vpack.c.b16 %v506, %v503
    %v693 = vpack.c.b16 %v510, %v507
    %v694 = vpack.c.b16 %v511, %v508
    %v695 = vpack.c.b16 %v512, %v509
    %v696 = vpack.c.b16 %v516, %v513
    %v697 = vpack.c.b16 %v517, %v514
    %v698 = vpack.c.b16 %v518, %v515
    %v699 = vpack.c.b16 %v522, %v519
    %v700 = vpack.c.b16 %v523, %v520
    %v701 = vpack.c.b16 %v524, %v521
    %v702 = vpack.c.b16 %v528, %v525
    %v703 = vpack.c.b16 %v529, %v526
    %v704 = vpack.c.b16 %v530, %v527
    %v705 = vpack.c.b16 %v534, %v531
    %v706 = vpack.c.b16 %v535, %v532
    %v707 = vpack.c.b16 %v536, %v533
    %v708 = vpack.c.b16 %v540, %v537
    %v709 = vpack.c.b16 %v541, %v538
    %v710 = vpack.c.b16 %v542, %v539
    %v711 = vpack.c.b16 %v546, %v543
    %v712 = vpack.c.b16 %v547, %v544
    %v713 = vpack.c.b16 %v548, %v545
    %v714 = vpack.c.b16 %v552, %v549
    %v715 = vpack.c.b16 %v553, %v550
    %v716 = vpack.c.b16 %v554, %v551
    %v717 = vpack.c.b16 %v558, %v555
    %v718 = vpack.c.b16 %v559, %v556
    %v719 = vpack.c.b16 %v560, %v557
    %v720 = vpack.c.b16 %v564, %v561
    %v721 = vpack.c.b16 %v565, %v562
    %v722 = vpack.c.b16 %v566, %v563
    %v723 = vpack.c.b16 %v570, %v567
    %v724 = vpack.c.b16 %v571, %v568
    %v725 = vpack.c.b16 %v572, %v569
    %v726 = vpack.c.b16 %v576, %v573
    %v727 = vpack.c.b16 %v577, %v574
    %v728 = vpack.c.b16 %v578, %v575
    %v729 = vpack.c.b16 %v582, %v579
    %v730 = vpack.c.b16 %v583, %v580
    %v731 = vpack.c.b16 %v584, %v581
    %v732 = vpack.c.b16 %v588, %v585
    %v733 = vpack.c.b16 %v589, %v586
    %v734 = vpack.c.b16 %v590, %v587
    %v735 = vpack.c.b16 %v594, %v591
    %v736 = vpack.c.b16 %v595, %v592
    %v737 = vpack.c.b16 %v596, %v593
    %v738 = vpack.c.b16 %v600, %v597
    %v739 = vpack.c.b16 %v601, %v598
    %v740 = vpack.c.b16 %v602, %v599
    %v741 = vpack.c.b16 %v606, %v603
    %v742 = vpack.c.b16 %v607, %v604
    %v743 = vpack.c.b16 %v608, %v605
    %v744 = vpack.c.b16 %v612, %v609
    %v745 = vpack.c.b16 %v613, %v610
    %v746 = vpack.c.b16 %v614, %v611
    %v747 = vpack.c.b16 %v618, %v615
    %v748 = vpack.c.b16 %v619, %v616
    %v749 = vpack.c.b16 %v620, %v617
    %v750 = vpack.c.b16 %v624, %v621
    %v751 = vpack.c.b16 %v625, %v622
    %v752 = vpack.c.b16 %v626, %v623
    %v753 = vpack.c.b16 %v630, %v627
    %v754 = vpack.c.b16 %v631, %v628
    %v755 = vpack.c.b16 %v632, %v629
    %v756 = vpack.c.b16 %v636, %v633
    %v757 = vpack.c.b16 %v637, %v634
    %v758 = vpack.c.b16 %v638, %v635
    %v759 = vpack.c.b16 %v642, %v639
    %v760 = vpack.c.b16 %v643, %v640
    %v761 = vpack.c.b16 %v644, %v641
    %v762 = vpack.c.b16 %v648, %v645
    %v763 = vpack.c.b16 %v649, %v646
    %v764 = vpack.c.b16 %v650, %v647
    %v765 = vpack.c.b16 %v654, %v651
    %v766 = vpack.c.b16 %v655, %v652
    %v767 = vpack.c.b16 %v656, %v653
    %v768 = vpack.c.b16 %v660, %v657
    %v769 = vpack.c.b16 %v661, %v658
    %v770 = vpack.c.b16 %v662, %v659
    %v771 = vpack.c.b16 %v666, %v663
    %v772 = vpack.c.b16 %v667, %v664
    %v773 = vpack.c.b16 %v668, %v665
    %v774 = vpack.c.b16 %v672, %v669
    %v775 = vpack.c.b16 %v673, %v670
    %v776 = vpack.c.b16 %v674, %v671
    %v777 = vpack.c.b16 %v678, %v675
    %v778 = vpack.c.b16 %v679, %v676
    %v779 = vpack.c.b16 %v680, %v677
    %v780 = vpack.c.b16 %v684, %v681
    %v781 = vpack.c.b16 %v685, %v682
    %v782 = vpack.c.b16 %v686, %v683
    %879 = vmatprep.subr.bf16.mxu0 %v688
    %880 = vmatpush1.bf16.msra.mxu0 %v687
    %881 = vmatprep.subr.bf16.mxu0 %v691
    %882 = vmatpush1.bf16.msra.mxu0 %v690
    %883 = vmatprep.subr.bf16.mxu0 %v694
    %884 = vmatpush1.bf16.msra.mxu0 %v693
    %885 = vmatprep.subr.bf16.mxu0 %v697
    %886 = vmatpush1.bf16.msra.mxu0 %v696
    %887 = vmatprep.subr.bf16.mxu0 %v700
    %888 = vmatpush1.bf16.msra.mxu0 %v699
    %889 = vmatprep.subr.bf16.mxu0 %v703
    %890 = vmatpush1.bf16.msra.mxu0 %v702
    %891 = vmatprep.subr.bf16.mxu0 %v706
    %892 = vmatpush1.bf16.msra.mxu0 %v705
    %893 = vmatprep.subr.bf16.mxu0 %v709
    %894 = vmatpush1.bf16.msra.mxu0 %v708
    %895 = vmatprep.subr.bf16.mxu0 %v712
    %896 = vmatpush1.bf16.msra.mxu0 %v711
    %897 = vmatprep.subr.bf16.mxu0 %v715
    %898 = vmatpush1.bf16.msra.mxu0 %v714
    %899 = vmatprep.subr.bf16.mxu0 %v718
    %900 = vmatpush1.bf16.msra.mxu0 %v717
    %901 = vmatprep.subr.bf16.mxu0 %v721
    %902 = vmatpush1.bf16.msra.mxu0 %v720
    %903 = vmatprep.subr.bf16.mxu0 %v724
    %904 = vmatpush1.bf16.msra.mxu0 %v723
    %905 = vmatprep.subr.bf16.mxu0 %v727
    %906 = vmatpush1.bf16.msra.mxu0 %v726
    %907 = vmatprep.subr.bf16.mxu0 %v730
    %908 = vmatpush1.bf16.msra.mxu0 %v729
    %909 = vmatprep.subr.bf16.mxu0 %v733
    %910 = vmatpush1.bf16.msra.mxu0 %v732
    %911 = vmatprep.mubr.bf16.mxu0 %v219
    %912 = vmatmul.mubr.bf16.gmra.mrb[0].mxu0 %v218
    %v913 = vpop.f32.mrb[0].mxu0
    %v914 = vadd.f32 %v355, %v913
    %v915 = vpop.f32.mrb[0].mxu0
    %v916 = vadd.f32 %v359, %v915
    %v917 = vpop.f32.mrb[0].mxu0
    %v918 = vpop.f32.mrb[0].mxu0
    %919 = vdwg.mxu0
    %920 = vmatprep.subr.bf16.mxu0 %v736
    %921 = vmatpush1.bf16.msra.mxu0 %v735
    %922 = vmatprep.subr.bf16.mxu0 %v739
    %923 = vmatpush1.bf16.msra.mxu0 %v738
    %924 = vmatprep.subr.bf16.mxu0 %v742
    %925 = vmatpush1.bf16.msra.mxu0 %v741
    %926 = vmatprep.subr.bf16.mxu0 %v745
    %927 = vmatpush1.bf16.msra.mxu0 %v744
    %928 = vmatprep.subr.bf16.mxu0 %v748
    %929 = vmatpush1.bf16.msra.mxu0 %v747
    %930 = vmatprep.subr.bf16.mxu0 %v751
    %931 = vmatpush1.bf16.msra.mxu0 %v750
    %932 = vmatprep.subr.bf16.mxu0 %v754
    %933 = vmatpush1.bf16.msra.mxu0 %v753
    %934 = vmatprep.subr.bf16.mxu0 %v757
    %935 = vmatpush1.bf16.msra.mxu0 %v756
    %936 = vmatprep.subr.bf16.mxu0 %v760
    %937 = vmatpush1.bf16.msra.mxu0 %v759
    %938 = vmatprep.subr.bf16.mxu0 %v763
    %939 = vmatpush1.bf16.msra.mxu0 %v762
    %940 = vmatprep.subr.bf16.mxu0 %v766
    %941 = vmatpush1.bf16.msra.mxu0 %v765
    %942 = vmatprep.subr.bf16.mxu0 %v769
    %943 = vmatpush1.bf16.msra.mxu0 %v768
    %944 = vmatprep.subr.bf16.mxu0 %v772
    %945 = vmatpush1.bf16.msra.mxu0 %v771
    %946 = vmatprep.subr.bf16.mxu0 %v775
    %947 = vmatpush1.bf16.msra.mxu0 %v774
    %948 = vmatprep.subr.bf16.mxu0 %v778
    %949 = vmatpush1.bf16.msra.mxu0 %v777
    %950 = vmatprep.subr.bf16.mxu0 %v781
    %951 = vmatpush1.bf16.msra.mxu0 %v780
    %952 = vmatprep.mubr.bf16.mxu0 %v221
    %953 = vmatmul.mubr.bf16.gmra.mrb[0].mxu0 %v220
    %v954 = vpop.f32.mrb[0].mxu0
    %v955 = vadd.f32 %v914, %v954
    %v956 = vpop.f32.mrb[0].mxu0
    %v957 = vadd.f32 %v916, %v956
    %v958 = vpop.f32.mrb[0].mxu0
    %v959 = vpop.f32.mrb[0].mxu0
    %960 = vdwg.mxu0
    %961 = vmatprep.subr.bf16.mxu0 0
    %962 = vmatpush1.bf16.msra.mxu0 %v689
    %963 = vmatprep.subr.bf16.mxu0 0
    %964 = vmatpush1.bf16.msra.mxu0 %v692
    %965 = vmatprep.subr.bf16.mxu0 0
    %966 = vmatpush1.bf16.msra.mxu0 %v695
    %967 = vmatprep.subr.bf16.mxu0 0
    %968 = vmatpush1.bf16.msra.mxu0 %v698
    %969 = vmatprep.subr.bf16.mxu0 0
    %970 = vmatpush1.bf16.msra.mxu0 %v701
    %971 = vmatprep.subr.bf16.mxu0 0
    %972 = vmatpush1.bf16.msra.mxu0 %v704
    %973 = vmatprep.subr.bf16.mxu0 0
    %974 = vmatpush1.bf16.msra.mxu0 %v707
    %975 = vmatprep.subr.bf16.mxu0 0
    %976 = vmatpush1.bf16.msra.mxu0 %v710
    %977 = vmatprep.subr.bf16.mxu0 0
    %978 = vmatpush1.bf16.msra.mxu0 %v713
    %979 = vmatprep.subr.bf16.mxu0 0
    %980 = vmatpush1.bf16.msra.mxu0 %v716
    %981 = vmatprep.subr.bf16.mxu0 0
    %982 = vmatpush1.bf16.msra.mxu0 %v719
    %983 = vmatprep.subr.bf16.mxu0 0
    %984 = vmatpush1.bf16.msra.mxu0 %v722
    %985 = vmatprep.subr.bf16.mxu0 0
    %986 = vmatpush1.bf16.msra.mxu0 %v725
    %987 = vmatprep.subr.bf16.mxu0 0
    %988 = vmatpush1.bf16.msra.mxu0 %v728
    %989 = vmatprep.subr.bf16.mxu0 0
    %990 = vmatpush1.bf16.msra.mxu0 %v731
    %991 = vmatprep.subr.bf16.mxu0 0
    %992 = vmatpush1.bf16.msra.mxu0 %v734
    %993 = vmatprep.mubr.bf16.mxu0 %v219
    %994 = vmatmul.mubr.bf16.gmra.mrb[0].mxu0 %v218
    %v995 = vpop.f32.mrb[0].mxu0
    %v996 = vadd.f32 %v363, %v995
    %v997 = vpop.f32.mrb[0].mxu0
    %v998 = vpop.f32.mrb[0].mxu0
    %v999 = vpop.f32.mrb[0].mxu0
    %1000 = vdwg.mxu0
    %1001 = vmatprep.subr.bf16.mxu0 0
    %1002 = vmatpush1.bf16.msra.mxu0 %v737
    %1003 = vmatprep.subr.bf16.mxu0 0
    %1004 = vmatpush1.bf16.msra.mxu0 %v740
    %1005 = vmatprep.subr.bf16.mxu0 0
    %1006 = vmatpush1.bf16.msra.mxu0 %v743
    %1007 = vmatprep.subr.bf16.mxu0 0
    %1008 = vmatpush1.bf16.msra.mxu0 %v746
    %1009 = vmatprep.subr.bf16.mxu0 0
    %1010 = vmatpush1.bf16.msra.mxu0 %v749
    %1011 = vmatprep.subr.bf16.mxu0 0
    %1012 = vmatpush1.bf16.msra.mxu0 %v752
    %1013 = vmatprep.subr.bf16.mxu0 0
    %1014 = vmatpush1.bf16.msra.mxu0 %v755
    %1015 = vmatprep.subr.bf16.mxu0 0
    %1016 = vmatpush1.bf16.msra.mxu0 %v758
    %1017 = vmatprep.subr.bf16.mxu0 0
    %1018 = vmatpush1.bf16.msra.mxu0 %v761
    %1019 = vmatprep.subr.bf16.mxu0 0
    %1020 = vmatpush1.bf16.msra.mxu0 %v764
    %1021 = vmatprep.subr.bf16.mxu0 0
    %1022 = vmatpush1.bf16.msra.mxu0 %v767
    %1023 = vmatprep.subr.bf16.mxu0 0
    %1024 = vmatpush1.bf16.msra.mxu0 %v770
    %1025 = vmatprep.subr.bf16.mxu0 0
    %1026 = vmatpush1.bf16.msra.mxu0 %v773
    %1027 = vmatprep.subr.bf16.mxu0 0
    %1028 = vmatpush1.bf16.msra.mxu0 %v776
    %1029 = vmatprep.subr.bf16.mxu0 0
    %1030 = vmatpush1.bf16.msra.mxu0 %v779
    %1031 = vmatprep.subr.bf16.mxu0 0
    %1032 = vmatpush1.bf16.msra.mxu0 %v782
    %1033 = vmatprep.mubr.bf16.mxu0 %v221
    %1034 = vmatmul.mubr.bf16.gmra.mrb[0].mxu0 %v220
    %v1035 = vpop.f32.mrb[0].mxu0
    %v1036 = vadd.f32 %v996, %v1035
    %v1037 = vpop.f32.mrb[0].mxu0
    %v1038 = vpop.f32.mrb[0].mxu0
    %v1039 = vpop.f32.mrb[0].mxu0
    %1040 = vdwg.mxu0
    %v1041 = vmax.f32 %v955, 0.0
    %v1042 = vmax.f32 %v957, 0.0
    %v1043 = vmax.f32 %v1036, 0.0
    %v1044 = vld [vmem:[#allocation8] sm:$0xff]
    %v1045 = vld [vmem:[#allocation8 + $0x8] sm:$0xff]
    %v1046 = vld [vmem:[#allocation8 + $0x10] sm:$0xff]
    %v1047 = vld [vmem:[#allocation8 + $0x18] sm:$0xff]
    %v1048 = vld [vmem:[#allocation8 + $0x20] sm:$0xff]
    %v1049 = vld [vmem:[#allocation8 + $0x28] sm:$0xff]
    %v1050 = vld [vmem:[#allocation8 + $0x30] sm:$0xff]
    %v1051 = vld [vmem:[#allocation8 + $0x38] sm:$0xff]
    %v1052 = vld [vmem:[#allocation8 + $0x40] sm:$0xff]
    %v1053 = vld [vmem:[#allocation8 + $0x48] sm:$0xff]
    %v1054 = vld [vmem:[#allocation8 + $0x50] sm:$0xff]
    %v1055 = vld [vmem:[#allocation8 + $0x58] sm:$0xff]
    %v1056 = vld [vmem:[#allocation8 + $0x60] sm:$0xff]
    %v1057 = vld [vmem:[#allocation8 + $0x68] sm:$0xff]
    %v1058 = vld [vmem:[#allocation8 + $0x70] sm:$0xff]
    %v1059 = vld [vmem:[#allocation8 + $0x78] sm:$0xff]
    %v1060 = vld [vmem:[#allocation8 + $0x80] sm:$0xff]
    %v1061 = vld [vmem:[#allocation8 + $0x88] sm:$0xff]
    %v1062 = vld [vmem:[#allocation8 + $0x90] sm:$0xff]
    %v1063 = vld [vmem:[#allocation8 + $0x98] sm:$0xff]
    %v1064 = vld [vmem:[#allocation8 + $0xa0] sm:$0xff]
    %v1065 = vld [vmem:[#allocation8 + $0xa8] sm:$0xff]
    %v1066 = vld [vmem:[#allocation8 + $0xb0] sm:$0xff]
    %v1067 = vld [vmem:[#allocation8 + $0xb8] sm:$0xff]
    %v1068 = vld [vmem:[#allocation8 + $0xc0] sm:$0xff]
    %v1069 = vld [vmem:[#allocation8 + $0xc8] sm:$0xff]
    %v1070 = vld [vmem:[#allocation8 + $0xd0] sm:$0xff]
    %v1071 = vld [vmem:[#allocation8 + $0xd8] sm:$0xff]
    %v1072 = vld [vmem:[#allocation8 + $0xe0] sm:$0xff]
    %v1073 = vld [vmem:[#allocation8 + $0xe8] sm:$0xff]
    %v1074 = vld [vmem:[#allocation8 + $0xf0] sm:$0xff]
    %v1075 = vld [vmem:[#allocation8 + $0xf8] sm:$0xff]
    %v1076 = vld [vmem:[#allocation8 + $0x100] sm:$0xff]
    %v1077 = vld [vmem:[#allocation8 + $0x108] sm:$0xff]
    %v1078 = vld [vmem:[#allocation8 + $0x110] sm:$0xff]
    %v1079 = vld [vmem:[#allocation8 + $0x118] sm:$0xff]
    %v1080 = vld [vmem:[#allocation8 + $0x120] sm:$0xff]
    %v1081 = vld [vmem:[#allocation8 + $0x128] sm:$0xff]
    %v1082 = vld [vmem:[#allocation8 + $0x130] sm:$0xff]
    %v1083 = vld [vmem:[#allocation8 + $0x138] sm:$0xff]
    %v1084 = vld [vmem:[#allocation8 + $0x140] sm:$0xff]
    %v1085 = vld [vmem:[#allocation8 + $0x148] sm:$0xff]
    %v1086 = vld [vmem:[#allocation8 + $0x150] sm:$0xff]
    %v1087 = vld [vmem:[#allocation8 + $0x158] sm:$0xff]
    %v1088 = vld [vmem:[#allocation8 + $0x160] sm:$0xff]
    %v1089 = vld [vmem:[#allocation8 + $0x168] sm:$0xff]
    %v1090 = vld [vmem:[#allocation8 + $0x170] sm:$0xff]
    %v1091 = vld [vmem:[#allocation8 + $0x178] sm:$0xff]
    %v1092 = vld [vmem:[%s6] sm:$0x1]
    %v1094 = vlaneseq
    %v1095 = vshrl.u32 %v1094, 7
    %v1096 = vsub.s32 0, %v1095
    %v1097 = vrot.slane %v1092, %v1096
    %1099 = vmatprep.subr.mxu0 0.0
    %1100 = vmatpush1.msra.mxu0 %v1044
    %1101 = vmatprep.subr.mxu0 0.0
    %1102 = vmatpush1.msra.mxu0 %v1045
    %1103 = vmatprep.subr.mxu0 0.0
    %1104 = vmatpush1.msra.mxu0 %v1046
    %1105 = vmatprep.subr.mxu0 0.0
    %1106 = vmatpush1.msra.mxu0 %v1047
    %1107 = vmatprep.subr.mxu0 0.0
    %1108 = vmatpush1.msra.mxu0 %v1048
    %1109 = vmatprep.subr.mxu0 0.0
    %1110 = vmatpush1.msra.mxu0 %v1049
    %1111 = vmatprep.subr.mxu0 0.0
    %1112 = vmatpush1.msra.mxu0 %v1050
    %1113 = vmatprep.subr.mxu0 0.0
    %1114 = vmatpush1.msra.mxu0 %v1051
    %1115 = vmatprep.subr.mxu0 0.0
    %1116 = vmatpush1.msra.mxu0 %v1052
    %1117 = vmatprep.subr.mxu0 0.0
    %1118 = vmatpush1.msra.mxu0 %v1053
    %1119 = vmatprep.subr.mxu0 0.0
    %1120 = vmatpush1.msra.mxu0 %v1054
    %1121 = vmatprep.subr.mxu0 0.0
    %1122 = vmatpush1.msra.mxu0 %v1055
    %1123 = vmatprep.subr.mxu0 0.0
    %1124 = vmatpush1.msra.mxu0 %v1056
    %1125 = vmatprep.subr.mxu0 0.0
    %1126 = vmatpush1.msra.mxu0 %v1057
    %1127 = vmatprep.subr.mxu0 0.0
    %1128 = vmatpush1.msra.mxu0 %v1058
    %1129 = vmatprep.subr.mxu0 0.0
    %1130 = vmatpush1.msra.mxu0 %v1059
    %1131 = vmatprep.subr.mxu0 0.0
    %1132 = vmatpush1.msra.mxu0 %v1060
    %1133 = vmatprep.subr.mxu0 0.0
    %1134 = vmatpush1.msra.mxu0 %v1061
    %1135 = vmatprep.subr.mxu0 0.0
    %1136 = vmatpush1.msra.mxu0 %v1062
    %1137 = vmatprep.subr.mxu0 0.0
    %1138 = vmatpush1.msra.mxu0 %v1063
    %1139 = vmatprep.subr.mxu0 0.0
    %1140 = vmatpush1.msra.mxu0 %v1064
    %1141 = vmatprep.subr.mxu0 0.0
    %1142 = vmatpush1.msra.mxu0 %v1065
    %1143 = vmatprep.subr.mxu0 0.0
    %1144 = vmatpush1.msra.mxu0 %v1066
    %1145 = vmatprep.subr.mxu0 0.0
    %1146 = vmatpush1.msra.mxu0 %v1067
    %1147 = vmatprep.subr.mxu0 0.0
    %1148 = vmatpush1.msra.mxu0 %v1068
    %1149 = vmatprep.subr.mxu0 0.0
    %1150 = vmatpush1.msra.mxu0 %v1069
    %1151 = vmatprep.subr.mxu0 0.0
    %1152 = vmatpush1.msra.mxu0 %v1070
    %1153 = vmatprep.subr.mxu0 0.0
    %1154 = vmatpush1.msra.mxu0 %v1071
    %1155 = vmatprep.subr.mxu0 0.0
    %1156 = vmatpush1.msra.mxu0 %v1072
    %1157 = vmatprep.subr.mxu0 0.0
    %1158 = vmatpush1.msra.mxu0 %v1073
    %1159 = vmatprep.subr.mxu0 0.0
    %1160 = vmatpush1.msra.mxu0 %v1074
    %1161 = vmatprep.subr.mxu0 0.0
    %1162 = vmatpush1.msra.mxu0 %v1075
    %1163 = vmatprep.mubr.f32.mxu0 %v1042
    %1164 = vmatmul.mubr.f32.gmra.mrb[0].mxu0 %v1041
    %v1165 = vpop.f32.mrb[0].mxu0
    %v1166 = vadd.f32 %v1097, %v1165
    %v1167 = vpop.f32.mrb[0].mxu0
    %1168 = vdwg.mxu0
    %1169 = vmatprep.subr.mxu0 0.0
    %1170 = vmatpush1.msra.mxu0 %v1076
    %1171 = vmatprep.subr.mxu0 0.0
    %1172 = vmatpush1.msra.mxu0 %v1077
    %1173 = vmatprep.subr.mxu0 0.0
    %1174 = vmatpush1.msra.mxu0 %v1078
    %1175 = vmatprep.subr.mxu0 0.0
    %1176 = vmatpush1.msra.mxu0 %v1079
    %1177 = vmatprep.subr.mxu0 0.0
    %1178 = vmatpush1.msra.mxu0 %v1080
    %1179 = vmatprep.subr.mxu0 0.0
    %1180 = vmatpush1.msra.mxu0 %v1081
    %1181 = vmatprep.subr.mxu0 0.0
    %1182 = vmatpush1.msra.mxu0 %v1082
    %1183 = vmatprep.subr.mxu0 0.0
    %1184 = vmatpush1.msra.mxu0 %v1083
    %1185 = vmatprep.subr.mxu0 0.0
    %1186 = vmatpush1.msra.mxu0 %v1084
    %1187 = vmatprep.subr.mxu0 0.0
    %1188 = vmatpush1.msra.mxu0 %v1085
    %1189 = vmatprep.subr.mxu0 0.0
    %1190 = vmatpush1.msra.mxu0 %v1086
    %1191 = vmatprep.subr.mxu0 0.0
    %1192 = vmatpush1.msra.mxu0 %v1087
    %1193 = vmatprep.subr.mxu0 0.0
    %1194 = vmatpush1.msra.mxu0 %v1088
    %1195 = vmatprep.subr.mxu0 0.0
    %1196 = vmatpush1.msra.mxu0 %v1089
    %1197 = vmatprep.subr.mxu0 0.0
    %1198 = vmatpush1.msra.mxu0 %v1090
    %1199 = vmatprep.subr.mxu0 0.0
    %1200 = vmatpush1.msra.mxu0 %v1091
    %1201 = vmatprep.subr.mxu0 0.0
    %1202 = vmatpush1.msra.mxu0 0.0
    %1203 = vmatprep.subr.mxu0 0.0
    %1204 = vmatpush1.msra.mxu0 0.0
    %1205 = vmatprep.subr.mxu0 0.0
    %1206 = vmatpush1.msra.mxu0 0.0
    %1207 = vmatprep.subr.mxu0 0.0
    %1208 = vmatpush1.msra.mxu0 0.0
    %1209 = vmatprep.subr.mxu0 0.0
    %1210 = vmatpush1.msra.mxu0 0.0
    %1211 = vmatprep.subr.mxu0 0.0
    %1212 = vmatpush1.msra.mxu0 0.0
    %1213 = vmatprep.subr.mxu0 0.0
    %1214 = vmatpush1.msra.mxu0 0.0
    %1215 = vmatprep.subr.mxu0 0.0
    %1216 = vmatpush1.msra.mxu0 0.0
    %1217 = vmatprep.subr.mxu0 0.0
    %1218 = vmatpush1.msra.mxu0 0.0
    %1219 = vmatprep.subr.mxu0 0.0
    %1220 = vmatpush1.msra.mxu0 0.0
    %1221 = vmatprep.subr.mxu0 0.0
    %1222 = vmatpush1.msra.mxu0 0.0
    %1223 = vmatprep.subr.mxu0 0.0
    %1224 = vmatpush1.msra.mxu0 0.0
    %1225 = vmatprep.subr.mxu0 0.0
    %1226 = vmatpush1.msra.mxu0 0.0
    %1227 = vmatprep.subr.mxu0 0.0
    %1228 = vmatpush1.msra.mxu0 0.0
    %1229 = vmatprep.subr.mxu0 0.0
    %1230 = vmatpush1.msra.mxu0 0.0
    %1231 = vmatprep.subr.mxu0 0.0
    %1232 = vmatpush1.msra.mxu0 0.0
    %1233 = vmatprep.mubr.f32.mxu0 0.0
    %1234 = vmatmul.mubr.f32.gmra.mrb[0].mxu0 %v1043
    %v1235 = vpop.f32.mrb[0].mxu0
    %v1236 = vadd.f32 %v1166, %v1235
    %v1237 = vpop.f32.mrb[0].mxu0
    %1238 = vdwg.mxu0
    %v1239 = vtanh.pop %v1236
    %v1240 = vmul.f32 %v1239, 2.0
    %1241 = vst [vmem:[#allocation10] sm:$0xff] %v1240
    // Predicated region
    $region46: #{tpu_custom_call.1} parent=1 // pred_check
      _
    $region47: #{tpu_custom_call.1} parent=1 // pred_check_branch
      %1243 = sbr.rel (0) target = $region49
    $region48: #{tpu_custom_call.1} parent=1 // pred_region
      %s1245 = ssub.s32 128, 128
      %1246 = vsyncadd [#allocation4], %s1245
      %s1248 = sshll.u32 [#allocation10], 4
      %s1249 = int_to_ptr.vmem [resolvable:$true] %s1248
      %1251 = dma.vmem_to_hbm [thread:$0]  %s1249, 128, %s7, [#allocation4]
    $region49: #{tpu_custom_call.1} parent=1 // pred_fallthru
      _
    // Predicated region
    $region50: #{tpu_custom_call.1} parent=1 // pred_check
      _
    $region51: #{tpu_custom_call.1} parent=1 // pred_check_branch
      %1253 = sbr.rel (0) target = $region53
    $region52: #{tpu_custom_call.1} parent=1 // pred_region
      %1254 = dma.done [#allocation4], 128
    $region53: #{tpu_custom_call.1} parent=1 // pred_fallthru
      _
    %1255 = vsyncpa [#allocation3], 1
    %1256 = vsyncpa [#allocation6], 1
    %1257 = vsyncpa [#allocation9], 1
    %1258 = vsyncpa [#allocation4], 1

</llo_original>
